<compile_context>
chip_gen: v7x
topology: tpu7x:2x2x1
jax: 0.10.0
libtpu: 0.0.40
codegen_flags: <defaults>
</compile_context>

<pallas_src>
import functools

import jax
import jax.numpy as jnp
from jax.experimental import pallas as pl
from jax.experimental.pallas import tpu as pltpu

_LANE = 128
_SUBLANE = 8


def _round_up(x, m):
    return ((x + m - 1) // m) * m


def _fused_mlp_kernel(s_ref, l_ref, t_ref, tab_ref, b1_ref, w2_ref, b2_ref,
                      w3_ref, b3_ref, o_ref, *, off_l, off_t):
    """Per batch-tile: multi-hot gather-matmul (fc1+bn1) -> relu -> fc2+bn2 ->
    relu -> fc3.  Dropout is identity in eval mode."""
    tb = s_ref.shape[0]
    vtot = tab_ref.shape[0]

    # Multi-hot [tb, vtot]: row r has ones at s[r], off_l+l[r], off_t+t[r].
    # hot @ tab == T_s[s] + T_l[l] + T_t[t]  (fc1 + bn1, bias separate).
    cols = jax.lax.broadcasted_iota(jnp.int32, (tb, vtot), 1)
    hot = ((cols == s_ref[...])
           | (cols == (l_ref[...] + off_l))
           | (cols == (t_ref[...] + off_t))).astype(jnp.float32)

    h1 = jnp.dot(hot, tab_ref[...], preferred_element_type=jnp.float32)
    h1 = jnp.maximum(h1 + b1_ref[...], 0.0)
    # dropout (eval) -> identity

    h2 = jnp.dot(h1, w2_ref[...], preferred_element_type=jnp.float32)
    h2 = jnp.maximum(h2 + b2_ref[...], 0.0)
    # dropout (eval) -> identity

    o_ref[...] = (jnp.dot(h2, w3_ref[...], preferred_element_type=jnp.float32)
                  + b3_ref[...])


def prepare_params(params, eps=1e-5):
    """One-time fold: BN1/BN2 into fc1/fc2, fc1 into the embedding tables,
    transpose + lane-pad all weights.  Hoisted out of the per-call path."""
    E = params["service_embed"].shape[1]
    H = params["fc1_w"].shape[0]
    H2 = params["fc2_w"].shape[0]
    O = params["fc3_w"].shape[0]
    n_s = params["service_embed"].shape[0]
    n_l = params["location_embed"].shape[0]
    n_t = params["time_embed"].shape[0]

    def fold(w_t, b, gamma, beta, mean, var):
        scale = gamma / jnp.sqrt(var + eps)
        shift = beta - mean * scale
        return w_t * scale[None, :], b * scale + shift

    w1f, b1f = fold(params["fc1_w"].T, params["fc1_b"],
                    params["bn1_gamma"], params["bn1_beta"],
                    params["bn1_mean"], params["bn1_var"])      # [3E, H], [H]
    w2f, b2f = fold(params["fc2_w"].T, params["fc2_b"],
                    params["bn2_gamma"], params["bn2_beta"],
                    params["bn2_mean"], params["bn2_var"])      # [H, H2], [H2]
    w3 = params["fc3_w"].T                                       # [H2, O]
    b3 = params["fc3_b"]

    # Fold fc1 (+bn1) into the embedding tables: per-vocab-row hidden vectors.
    t_s = params["service_embed"] @ w1f[:E]                      # [n_s, H]
    t_l = params["location_embed"] @ w1f[E:2 * E]                # [n_l, H]
    t_t = params["time_embed"] @ w1f[2 * E:]                     # [n_t, H]
    tab = jnp.concatenate([t_s, t_l, t_t], axis=0)               # [n_s+n_l+n_t, H]

    Hp = _round_up(H, _LANE)
    H2p = _round_up(H2, _LANE)
    Vp = _round_up(n_s + n_l + n_t, _SUBLANE)

    def pad2(a, rows, cols):
        return jnp.pad(a, ((0, rows - a.shape[0]), (0, cols - a.shape[1])))

    return {
        "tab": pad2(tab, Vp, Hp),            # [Vp, Hp]   (~28 KB, VMEM-resident)
        "b1": pad2(b1f[None, :], 1, Hp),     # [1, Hp]
        "w2": pad2(w2f, Hp, H2p),            # [Hp, H2p]
        "b2": pad2(b2f[None, :], 1, H2p),    # [1, H2p]
        "w3": pad2(w3, H2p, O),              # [H2p, O]   (no lane padding on O)
        "b3": b3[None, :],                   # [1, O]
        "off_l": int(n_s),                   # static row offsets into tab
        "off_t": int(n_s + n_l),
        "out_dim": int(O),
    }


def autofill_forward(s_idx, l_idx, t_idx, fused, *, batch_tile=2048):
    """Forward pass of AutoFillEmbeddingNN (eval mode) using prepared params."""
    B = s_idx.shape[0]
    O = fused["out_dim"]

    # Batch tiling: as few tiles as possible (<= batch_tile rows each), sized
    # to the batch so padding stays below one tile; keep >= 2 grid steps when
    # the batch allows it so v7x's two TensorCores both get a share.
    if B >= 2 * _SUBLANE:
        tiles = max(pl.cdiv(B, batch_tile), 2)
    else:
        tiles = 1
    tb = _round_up(pl.cdiv(B, tiles), _SUBLANE)
    Bp = _round_up(B, tb)
    grid = (Bp // tb,)

    def prep_idx(idx):
        idx = idx.astype(jnp.int32).reshape(-1, 1)
        if Bp != B:
            idx = jnp.pad(idx, ((0, Bp - B), (0, 0)))
        return idx

    s2, l2, t2 = prep_idx(s_idx), prep_idx(l_idx), prep_idx(t_idx)

    idx_spec = pl.BlockSpec((tb, 1), lambda i: (i, 0))

    def resident(a):  # weights: constant block index -> stays resident in VMEM
        return pl.BlockSpec(a.shape, lambda i: (0, 0))

    kernel = functools.partial(_fused_mlp_kernel,
                               off_l=fused["off_l"], off_t=fused["off_t"])

    out = pl.pallas_call(
        kernel,
        out_shape=jax.ShapeDtypeStruct((Bp, O), jnp.float32),
        grid_spec=pltpu.PrefetchScalarGridSpec(
            num_scalar_prefetch=0,
            grid=grid,
            in_specs=[idx_spec, idx_spec, idx_spec,
                      resident(fused["tab"]), resident(fused["b1"]),
                      resident(fused["w2"]), resident(fused["b2"]),
                      resident(fused["w3"]), resident(fused["b3"])],
            out_specs=pl.BlockSpec((tb, O), lambda i: (i, 0)),
        ),
        compiler_params=pltpu.CompilerParams(
            dimension_semantics=("parallel",),
            vmem_limit_bytes=48 * 1024 * 1024),
    )(s2, l2, t2,
      fused["tab"], fused["b1"], fused["w2"], fused["b2"],
      fused["w3"], fused["b3"])

    return out[:B] if Bp != B else out


def _reference_forward(s_idx, l_idx, t_idx, params):
    """Pure-JAX reference for correctness check (eval-mode module)."""
    s_embed = jnp.take(params["service_embed"], s_idx, axis=0)
    l_embed = jnp.take(params["location_embed"], l_idx, axis=0)
    t_embed = jnp.take(params["time_embed"], t_idx, axis=0)
    x = jnp.concatenate([s_embed, l_embed, t_embed], axis=1)
    eps = 1e-5

    h = x @ params["fc1_w"].T + params["fc1_b"]
    h = (h - params["bn1_mean"]) / jnp.sqrt(params["bn1_var"] + eps)
    h = h * params["bn1_gamma"] + params["bn1_beta"]
    h = jnp.maximum(h, 0.0)

    h = h @ params["fc2_w"].T + params["fc2_b"]
    h = (h - params["bn2_mean"]) / jnp.sqrt(params["bn2_var"] + eps)
    h = h * params["bn2_gamma"] + params["bn2_beta"]
    h = jnp.maximum(h, 0.0)

    return h @ params["fc3_w"].T + params["fc3_b"]


def init_params(key, n_service, n_location, n_time,
                embedding_dim, hidden_size, output_size):
    ks = jax.random.split(key, 12)
    f32 = jnp.float32
    h2 = hidden_size // 2
    return {
        "service_embed": jax.random.normal(ks[0], (n_service, embedding_dim), f32),
        "location_embed": jax.random.normal(ks[1], (n_location, embedding_dim), f32),
        "time_embed": jax.random.normal(ks[2], (n_time, embedding_dim), f32),
        "fc1_w": jax.random.normal(ks[3], (hidden_size, embedding_dim * 3), f32) * 0.1,
        "fc1_b": jax.random.normal(ks[4], (hidden_size,), f32) * 0.1,
        "fc2_w": jax.random.normal(ks[5], (h2, hidden_size), f32) * 0.1,
        "fc2_b": jax.random.normal(ks[6], (h2,), f32) * 0.1,
        "fc3_w": jax.random.normal(ks[7], (output_size, h2), f32) * 0.1,
        "fc3_b": jax.random.normal(ks[8], (output_size,), f32) * 0.1,
        # BatchNorm affine params + running stats (eval mode)
        "bn1_gamma": jnp.ones((hidden_size,), f32),
        "bn1_beta": jnp.zeros((hidden_size,), f32),
        "bn1_mean": jax.random.normal(ks[9], (hidden_size,), f32) * 0.05,
        "bn1_var": jnp.ones((hidden_size,), f32),
        "bn2_gamma": jnp.ones((h2,), f32),
        "bn2_beta": jnp.zeros((h2,), f32),
        "bn2_mean": jax.random.normal(ks[10], (h2,), f32) * 0.05,
        "bn2_var": jnp.ones((h2,), f32),
    }


if __name__ == "__main__":
    # Small, module-consistent sizes.
    n_service, n_location, n_time = 10, 20, 24
    embedding_dim, hidden_size, output_size = 16, 32, 4

    key = jax.random.PRNGKey(0)
    pkey, k_s, k_l, k_t = jax.random.split(key, 4)
    params = init_params(pkey, n_service, n_location, n_time,
                         embedding_dim, hidden_size, output_size)
    fused = prepare_params(params)   # one-time fold/pad, hoisted off hot path

    # Test 1: tiny batch (single grid step).
    batch = 8
    s_idx = jax.random.randint(k_s, (batch,), 0, n_service)
    l_idx = jax.random.randint(k_l, (batch,), 0, n_location)
    t_idx = jax.random.randint(k_t, (batch,), 0, n_time)
    out = jax.block_until_ready(autofill_forward(s_idx, l_idx, t_idx, fused))
    ref = jax.block_until_ready(_reference_forward(s_idx, l_idx, t_idx, params))
    assert out.shape == (batch, output_size)
    assert jnp.allclose(out, ref, atol=1e-4, rtol=1e-4), "mismatch vs reference (B=8)"

    # Test 2: batch that exercises multi-tile grid + row padding.
    batch2 = 300
    k_s2, k_l2, k_t2 = jax.random.split(jax.random.PRNGKey(1), 3)
    s2 = jax.random.randint(k_s2, (batch2,), 0, n_service)
    l2 = jax.random.randint(k_l2, (batch2,), 0, n_location)
    t2 = jax.random.randint(k_t2, (batch2,), 0, n_time)
    out2 = jax.block_until_ready(autofill_forward(s2, l2, t2, fused))
    ref2 = jax.block_until_ready(_reference_forward(s2, l2, t2, params))
    assert out2.shape == (batch2, output_size)
    assert jnp.allclose(out2, ref2, atol=1e-4, rtol=1e-4), "mismatch vs reference (B=300)"

    print("KERNEL_OK")
</pallas_src>

<mosaic_0001>
module attributes {stable_mosaic.version = 11 : i64} {
  func.func @_fused_mlp_kernel(%arg0: i32, %arg1: memref<8x1xi32, #tpu.memory_space<vmem>>, %arg2: memref<8x1xi32, #tpu.memory_space<vmem>>, %arg3: memref<8x1xi32, #tpu.memory_space<vmem>>, %arg4: memref<56x128xf32, #tpu.memory_space<vmem>>, %arg5: memref<1x128xf32, #tpu.memory_space<vmem>>, %arg6: memref<128x128xf32, #tpu.memory_space<vmem>>, %arg7: memref<1x128xf32, #tpu.memory_space<vmem>>, %arg8: memref<128x4xf32, #tpu.memory_space<vmem>>, %arg9: memref<1x4xf32, #tpu.memory_space<vmem>>, %arg10: memref<8x4xf32, #tpu.memory_space<vmem>>) attributes {dimension_semantics = [#tpu.dimension_semantics<parallel>], iteration_bounds = array<i64: 1>, scalar_prefetch = 0 : i64, scratch_operands = 0 : i64, tpu.core_type = #tpu.core_type<tc>, window_params = [{transform_indices = @transform_0, window_bounds = array<i64: 8, 1>}, {transform_indices = @transform_1, window_bounds = array<i64: 8, 1>}, {transform_indices = @transform_2, window_bounds = array<i64: 8, 1>}, {pipeline_mode = #tpu.pipeline_mode<synchronous>, transform_indices = @transform_3, window_bounds = array<i64: 56, 128>}, {pipeline_mode = #tpu.pipeline_mode<synchronous>, transform_indices = @transform_4, window_bounds = array<i64: 1, 128>}, {pipeline_mode = #tpu.pipeline_mode<synchronous>, transform_indices = @transform_5, window_bounds = array<i64: 128, 128>}, {pipeline_mode = #tpu.pipeline_mode<synchronous>, transform_indices = @transform_6, window_bounds = array<i64: 1, 128>}, {pipeline_mode = #tpu.pipeline_mode<synchronous>, transform_indices = @transform_7, window_bounds = array<i64: 128, 4>}, {pipeline_mode = #tpu.pipeline_mode<synchronous>, transform_indices = @transform_8, window_bounds = array<i64: 1, 4>}, {transform_indices = @transform_9, window_bounds = array<i64: 8, 4>}]} {
    %0 = tpu.iota {dimensions = array<i32: 1>} : vector<8x56xi32>
    %c0 = arith.constant 0 : index
    %c0_0 = arith.constant 0 : index
    %1 = vector.load %arg1[%c0, %c0_0] : memref<8x1xi32, #tpu.memory_space<vmem>>, vector<8x1xi32>
    %2 = vector.broadcast %1 : vector<8x1xi32> to vector<8x56xi32>
    %3 = arith.cmpi eq, %0, %2 : vector<8x56xi32>
    %c0_1 = arith.constant 0 : index
    %c0_2 = arith.constant 0 : index
    %4 = vector.load %arg2[%c0_1, %c0_2] : memref<8x1xi32, #tpu.memory_space<vmem>>, vector<8x1xi32>
    %c10_i32 = arith.constant 10 : i32
    %5 = vector.broadcast %c10_i32 : i32 to vector<8x1xi32>
    %6 = arith.addi %4, %5 : vector<8x1xi32>
    %7 = vector.broadcast %6 : vector<8x1xi32> to vector<8x56xi32>
    %8 = arith.cmpi eq, %0, %7 : vector<8x56xi32>
    %9 = arith.ori %3, %8 : vector<8x56xi1>
    %c0_3 = arith.constant 0 : index
    %c0_4 = arith.constant 0 : index
    %10 = vector.load %arg3[%c0_3, %c0_4] : memref<8x1xi32, #tpu.memory_space<vmem>>, vector<8x1xi32>
    %c30_i32 = arith.constant 30 : i32
    %11 = vector.broadcast %c30_i32 : i32 to vector<8x1xi32>
    %12 = arith.addi %10, %11 : vector<8x1xi32>
    %13 = vector.broadcast %12 : vector<8x1xi32> to vector<8x56xi32>
    %14 = arith.cmpi eq, %0, %13 : vector<8x56xi32>
    %15 = arith.ori %9, %14 : vector<8x56xi1>
    %16 = arith.extui %15 : vector<8x56xi1> to vector<8x56xi32>
    %17 = arith.sitofp %16 : vector<8x56xi32> to vector<8x56xf32>
    %c0_5 = arith.constant 0 : index
    %c0_6 = arith.constant 0 : index
    %18 = vector.load %arg4[%c0_5, %c0_6] : memref<56x128xf32, #tpu.memory_space<vmem>>, vector<56x128xf32>
    %cst = arith.constant dense<0.000000e+00> : vector<8x128xf32>
    %19 = tpu.matmul %17, %18, %cst {dimension_numbers = #tpu.dot_dimension_numbers<[1], [0], [0], [1], [0, 0, 1, 1], [], []>} : vector<8x56xf32>, vector<56x128xf32>, vector<8x128xf32> -> vector<8x128xf32>
    %c0_7 = arith.constant 0 : index
    %c0_8 = arith.constant 0 : index
    %20 = vector.load %arg5[%c0_7, %c0_8] : memref<1x128xf32, #tpu.memory_space<vmem>>, vector<1x128xf32>
    %21 = vector.broadcast %20 : vector<1x128xf32> to vector<8x128xf32>
    %22 = arith.addf %19, %21 : vector<8x128xf32>
    %cst_9 = arith.constant 0.000000e+00 : f32
    %23 = vector.broadcast %cst_9 : f32 to vector<8x128xf32>
    %24 = arith.maximumf %22, %23 : vector<8x128xf32>
    %c0_10 = arith.constant 0 : index
    %c0_11 = arith.constant 0 : index
    %25 = vector.load %arg6[%c0_10, %c0_11] : memref<128x128xf32, #tpu.memory_space<vmem>>, vector<128x128xf32>
    %cst_12 = arith.constant dense<0.000000e+00> : vector<8x128xf32>
    %26 = tpu.matmul %24, %25, %cst_12 {dimension_numbers = #tpu.dot_dimension_numbers<[1], [0], [0], [1], [0, 0, 1, 1], [], []>} : vector<8x128xf32>, vector<128x128xf32>, vector<8x128xf32> -> vector<8x128xf32>
    %c0_13 = arith.constant 0 : index
    %c0_14 = arith.constant 0 : index
    %27 = vector.load %arg7[%c0_13, %c0_14] : memref<1x128xf32, #tpu.memory_space<vmem>>, vector<1x128xf32>
    %28 = vector.broadcast %27 : vector<1x128xf32> to vector<8x128xf32>
    %29 = arith.addf %26, %28 : vector<8x128xf32>
    %cst_15 = arith.constant 0.000000e+00 : f32
    %30 = vector.broadcast %cst_15 : f32 to vector<8x128xf32>
    %31 = arith.maximumf %29, %30 : vector<8x128xf32>
    %c0_16 = arith.constant 0 : index
    %c0_17 = arith.constant 0 : index
    %32 = vector.load %arg8[%c0_16, %c0_17] : memref<128x4xf32, #tpu.memory_space<vmem>>, vector<128x4xf32>
    %cst_18 = arith.constant dense<0.000000e+00> : vector<8x4xf32>
    %33 = tpu.matmul %31, %32, %cst_18 {dimension_numbers = #tpu.dot_dimension_numbers<[1], [0], [0], [1], [0, 0, 1, 1], [], []>} : vector<8x128xf32>, vector<128x4xf32>, vector<8x4xf32> -> vector<8x4xf32>
    %c0_19 = arith.constant 0 : index
    %c0_20 = arith.constant 0 : index
    %34 = vector.load %arg9[%c0_19, %c0_20] : memref<1x4xf32, #tpu.memory_space<vmem>>, vector<1x4xf32>
    %35 = vector.broadcast %34 : vector<1x4xf32> to vector<8x4xf32>
    %36 = arith.addf %33, %35 : vector<8x4xf32>
    %c0_21 = arith.constant 0 : index
    %c0_22 = arith.constant 0 : index
    %37 = vector.load %arg10[%c0_21, %c0_22] : memref<8x4xf32, #tpu.memory_space<vmem>>, vector<8x4xf32>
    tpu.vector_store %arg10[%c0_21, %c0_22], %36 {strides = array<i32>} : memref<8x4xf32, #tpu.memory_space<vmem>>, vector<8x4xf32>,
    return
  }
  func.func @transform_0(%arg0: i32) -> (i32, i32) {
    %c0_i32 = arith.constant 0 : i32
    %c0_i32_0 = arith.constant 0 : i32
    return %arg0, %c0_i32 : i32, i32
  }
  func.func @transform_1(%arg0: i32) -> (i32, i32) {
    %c0_i32 = arith.constant 0 : i32
    %c0_i32_0 = arith.constant 0 : i32
    return %arg0, %c0_i32 : i32, i32
  }
  func.func @transform_2(%arg0: i32) -> (i32, i32) {
    %c0_i32 = arith.constant 0 : i32
    %c0_i32_0 = arith.constant 0 : i32
    return %arg0, %c0_i32 : i32, i32
  }
  func.func @transform_3(%arg0: i32) -> (i32, i32) {
    %c0_i32 = arith.constant 0 : i32
    %c0_i32_0 = arith.constant 0 : i32
    %c0_i32_1 = arith.constant 0 : i32
    return %c0_i32, %c0_i32_0 : i32, i32
  }
  func.func @transform_4(%arg0: i32) -> (i32, i32) {
    %c0_i32 = arith.constant 0 : i32
    %c0_i32_0 = arith.constant 0 : i32
    %c0_i32_1 = arith.constant 0 : i32
    return %c0_i32, %c0_i32_0 : i32, i32
  }
  func.func @transform_5(%arg0: i32) -> (i32, i32) {
    %c0_i32 = arith.constant 0 : i32
    %c0_i32_0 = arith.constant 0 : i32
    %c0_i32_1 = arith.constant 0 : i32
    return %c0_i32, %c0_i32_0 : i32, i32
  }
  func.func @transform_6(%arg0: i32) -> (i32, i32) {
    %c0_i32 = arith.constant 0 : i32
    %c0_i32_0 = arith.constant 0 : i32
    %c0_i32_1 = arith.constant 0 : i32
    return %c0_i32, %c0_i32_0 : i32, i32
  }
  func.func @transform_7(%arg0: i32) -> (i32, i32) {
    %c0_i32 = arith.constant 0 : i32
    %c0_i32_0 = arith.constant 0 : i32
    %c0_i32_1 = arith.constant 0 : i32
    return %c0_i32, %c0_i32_0 : i32, i32
  }
  func.func @transform_8(%arg0: i32) -> (i32, i32) {
    %c0_i32 = arith.constant 0 : i32
    %c0_i32_0 = arith.constant 0 : i32
    %c0_i32_1 = arith.constant 0 : i32
    return %c0_i32, %c0_i32_0 : i32, i32
  }
  func.func @transform_9(%arg0: i32) -> (i32, i32) {
    %c0_i32 = arith.constant 0 : i32
    %c0_i32_0 = arith.constant 0 : i32
    return %arg0, %c0_i32 : i32, i32
  }
}

</mosaic_0001>

<llo_original>
// kernel: tpu_custom_call.1
$region0: #{tpu_custom_call.1}
  #allocation0 [shape = 'u32[]', space=smem, size = 0x4, offset = 0x4, fixed_abs, tag = 'smem constant byte address 0x4 - core index']
  #allocation1 [shape = 'u32[144,128]{1,0:T(1,128)}', space=vmem, size = 0x12000, scoped, tag = 'internal scratch']
  %s0 = inlined_call_operand.vmem [shape: s32[8,1], index: 0, kind: input, shape index: {}]
  %s1 = inlined_call_operand.vmem [shape: s32[8,1], index: 1, kind: input, shape index: {}]
  %s2 = inlined_call_operand.vmem [shape: s32[8,1], index: 2, kind: input, shape index: {}]
  %s3 = inlined_call_operand.hbm [shape: f32[56,128], index: 3, kind: input, shape index: {}]
  %s4 = inlined_call_operand.vmem [shape: f32[1,128], index: 4, kind: input, shape index: {}]
  %s5 = inlined_call_operand.vmem [shape: f32[128,128], index: 5, kind: input, shape index: {}]
  %s6 = inlined_call_operand.vmem [shape: f32[1,128], index: 6, kind: input, shape index: {}]
  %s7 = inlined_call_operand.vmem [shape: f32[128,4], index: 7, kind: input, shape index: {}]
  %s8 = inlined_call_operand.vmem [shape: f32[1,4], index: 8, kind: input, shape index: {}]
  %s9 = inlined_call_operand.vmem [shape: f32[8,4], index: 9, kind: output, shape index: {}]
  %s10 = sld [smem:[#allocation0]]
  $region50: #{tpu_custom_call.1} parent=0
    _
  %s12 = ssub.s32 1, %s10
  %s13 = scalar_select 0, %s12, %s10
  $region1: #{tpu_custom_call.1} parent=0
    #allocation2 [shape = 'u8[28672]{0}', space=vmem, size = 0x7000, scoped, tag = 'input window, operand 3, single buffered']
    #allocation3 [shape = 's32[1]{0}', space=sflag, size = 0x4, scoped, tag = 'scoped memory for tpu_custom_call.1']
    %14 = vsyncpa [#allocation3], 0
    // Predicated region
    $region2: #{tpu_custom_call.1} parent=1 // pred_check
      _
    $region3: #{tpu_custom_call.1} parent=1 // pred_check_branch
      %16 = sbr.rel (0) target = $region5
    $region4: #{tpu_custom_call.1} parent=1 // pred_region
      _
    $region5: #{tpu_custom_call.1} parent=1 // pred_fallthru
      _
    // Predicated region
    $region6: #{tpu_custom_call.1} parent=1 // pred_check
      _
    $region7: #{tpu_custom_call.1} parent=1 // pred_check_branch
      %18 = sbr.rel (0) target = $region9
    $region8: #{tpu_custom_call.1} parent=1 // pred_region
      _
    $region9: #{tpu_custom_call.1} parent=1 // pred_fallthru
      _
    // Predicated region
    $region10: #{tpu_custom_call.1} parent=1 // pred_check
      _
    $region11: #{tpu_custom_call.1} parent=1 // pred_check_branch
      %20 = sbr.rel (0) target = $region13
    $region12: #{tpu_custom_call.1} parent=1 // pred_region
      _
    $region13: #{tpu_custom_call.1} parent=1 // pred_fallthru
      _
    // Predicated region
    $region14: #{tpu_custom_call.1} parent=1 // pred_check
      _
    $region15: #{tpu_custom_call.1} parent=1 // pred_check_branch
      %22 = sbr.rel (0) target = $region17
    $region16: #{tpu_custom_call.1} parent=1 // pred_region
      %s24 = ssub.s32 896, 896
      %25 = vsyncadd [#allocation3], %s24
      %s26 = sshll.u32 [#allocation2], 4
      %s27 = int_to_ptr.vmem [resolvable:$true] %s26
      %32 = dma.hbm_to_vmem [thread:$0]  %s3, 896, %s27, [#allocation3], 128, 128, 8
    $region17: #{tpu_custom_call.1} parent=1 // pred_fallthru
      _
    // Predicated region
    $region18: #{tpu_custom_call.1} parent=1 // pred_check
      _
    $region19: #{tpu_custom_call.1} parent=1 // pred_check_branch
      %34 = sbr.rel (0) target = $region21
    $region20: #{tpu_custom_call.1} parent=1 // pred_region
      _
    $region21: #{tpu_custom_call.1} parent=1 // pred_fallthru
      _
    // Predicated region
    $region22: #{tpu_custom_call.1} parent=1 // pred_check
      _
    $region23: #{tpu_custom_call.1} parent=1 // pred_check_branch
      %36 = sbr.rel (0) target = $region25
    $region24: #{tpu_custom_call.1} parent=1 // pred_region
      _
    $region25: #{tpu_custom_call.1} parent=1 // pred_fallthru
      _
    // Predicated region
    $region26: #{tpu_custom_call.1} parent=1 // pred_check
      _
    $region27: #{tpu_custom_call.1} parent=1 // pred_check_branch
      %38 = sbr.rel (0) target = $region29
    $region28: #{tpu_custom_call.1} parent=1 // pred_region
      _
    $region29: #{tpu_custom_call.1} parent=1 // pred_fallthru
      _
    // Predicated region
    $region30: #{tpu_custom_call.1} parent=1 // pred_check
      _
    $region31: #{tpu_custom_call.1} parent=1 // pred_check_branch
      %40 = sbr.rel (0) target = $region33
    $region32: #{tpu_custom_call.1} parent=1 // pred_region
      _
    $region33: #{tpu_custom_call.1} parent=1 // pred_fallthru
      _
    // Predicated region
    $region34: #{tpu_custom_call.1} parent=1 // pred_check
      _
    $region35: #{tpu_custom_call.1} parent=1 // pred_check_branch
      %42 = sbr.rel (0) target = $region37
    $region36: #{tpu_custom_call.1} parent=1 // pred_region
      _
    $region37: #{tpu_custom_call.1} parent=1 // pred_fallthru
      _
    // Predicated region
    $region38: #{tpu_custom_call.1} parent=1 // pred_check
      _
    $region39: #{tpu_custom_call.1} parent=1 // pred_check_branch
      %44 = sbr.rel (0) target = $region41
    $region40: #{tpu_custom_call.1} parent=1 // pred_region
      %45 = dma.done [#allocation3], 896
    $region41: #{tpu_custom_call.1} parent=1 // pred_fallthru
      _
    %v46 = vlaneseq
    %v47 = vand.u32 %v46, 127
    %v48 = vld [vmem:[%s0] sm:$0xff]
    %49 = vset.pattern.permute.xlu0 0
    %50 = vperm.xlu0 %49, %v48
    %v51 = vpop.permute.xlu0 %50
    %vm52 = vcmp.eq.s32.totalorder %v47, %v51
    %v53 = vld [vmem:[%s1] sm:$0xff]
    %v54 = vadd.s32 %v53, 10
    %55 = vset.pattern.permute.xlu0 0
    %56 = vperm.xlu0 %55, %v54
    %v57 = vpop.permute.xlu0 %56
    %vm58 = vcmp.eq.s32.totalorder %v47, %v57
    %vm59 = vmor %vm52, %vm58
    %v60 = vld [vmem:[%s2] sm:$0xff]
    %v61 = vadd.s32 %v60, 30
    %62 = vset.pattern.permute.xlu0 0
    %63 = vperm.xlu0 %62, %v61
    %v64 = vpop.permute.xlu0 %63
    %vm65 = vcmp.eq.s32.totalorder %v47, %v64
    %vm66 = vmor %vm59, %vm65
    %v67 = vsel %vm66, 1, 0
    %v68 = vcvt.s32.f32 %v67
    %v69 = vld [vmem:[#allocation2] sm:$0xff]
    %v70 = vld [vmem:[#allocation2 + $0x8] sm:$0xff]
    %v71 = vld [vmem:[#allocation2 + $0x10] sm:$0xff]
    %v72 = vld [vmem:[#allocation2 + $0x18] sm:$0xff]
    %v73 = vld [vmem:[#allocation2 + $0x20] sm:$0xff]
    %v74 = vld [vmem:[#allocation2 + $0x28] sm:$0xff]
    %v75 = vld [vmem:[#allocation2 + $0x30] sm:$0xff]
    %v76 = vld [vmem:[%s4] sm:$0x1]
    %v78 = vlaneseq
    %v79 = vshrl.u32 %v78, 7
    %v80 = vsub.s32 0, %v79
    %v81 = vrot.slane %v76, %v80
    %vm83 = vcmask 457728
    %v85 = vsel %vm83, %v68, 0
    %87 = vmatprep.subr.mxu0 0.0
    %88 = vmatpush1.msra.mxu0 %v69
    %89 = vmatprep.subr.mxu0 0.0
    %90 = vmatpush1.msra.mxu0 %v70
    %91 = vmatprep.subr.mxu0 0.0
    %92 = vmatpush1.msra.mxu0 %v71
    %93 = vmatprep.subr.mxu0 0.0
    %94 = vmatpush1.msra.mxu0 %v72
    %95 = vmatprep.subr.mxu0 0.0
    %96 = vmatpush1.msra.mxu0 %v73
    %97 = vmatprep.subr.mxu0 0.0
    %98 = vmatpush1.msra.mxu0 %v74
    %99 = vmatprep.subr.mxu0 0.0
    %100 = vmatpush1.msra.mxu0 %v75
    %101 = vmatprep.subr.mxu0 0.0
    %102 = vmatpush1.msra.mxu0 0.0
    %103 = vmatprep.subr.mxu0 0.0
    %104 = vmatpush1.msra.mxu0 0.0
    %105 = vmatprep.subr.mxu0 0.0
    %106 = vmatpush1.msra.mxu0 0.0
    %107 = vmatprep.subr.mxu0 0.0
    %108 = vmatpush1.msra.mxu0 0.0
    %109 = vmatprep.subr.mxu0 0.0
    %110 = vmatpush1.msra.mxu0 0.0
    %111 = vmatprep.subr.mxu0 0.0
    %112 = vmatpush1.msra.mxu0 0.0
    %113 = vmatprep.subr.mxu0 0.0
    %114 = vmatpush1.msra.mxu0 0.0
    %115 = vmatprep.subr.mxu0 0.0
    %116 = vmatpush1.msra.mxu0 0.0
    %117 = vmatprep.subr.mxu0 0.0
    %118 = vmatpush1.msra.mxu0 0.0
    %119 = vmatprep.subr.mxu0 0.0
    %120 = vmatpush1.msra.mxu0 0.0
    %121 = vmatprep.subr.mxu0 0.0
    %122 = vmatpush1.msra.mxu0 0.0
    %123 = vmatprep.subr.mxu0 0.0
    %124 = vmatpush1.msra.mxu0 0.0
    %125 = vmatprep.subr.mxu0 0.0
    %126 = vmatpush1.msra.mxu0 0.0
    %127 = vmatprep.subr.mxu0 0.0
    %128 = vmatpush1.msra.mxu0 0.0
    %129 = vmatprep.subr.mxu0 0.0
    %130 = vmatpush1.msra.mxu0 0.0
    %131 = vmatprep.subr.mxu0 0.0
    %132 = vmatpush1.msra.mxu0 0.0
    %133 = vmatprep.subr.mxu0 0.0
    %134 = vmatpush1.msra.mxu0 0.0
    %135 = vmatprep.subr.mxu0 0.0
    %136 = vmatpush1.msra.mxu0 0.0
    %137 = vmatprep.subr.mxu0 0.0
    %138 = vmatpush1.msra.mxu0 0.0
    %139 = vmatprep.subr.mxu0 0.0
    %140 = vmatpush1.msra.mxu0 0.0
    %141 = vmatprep.subr.mxu0 0.0
    %142 = vmatpush1.msra.mxu0 0.0
    %143 = vmatprep.subr.mxu0 0.0
    %144 = vmatpush1.msra.mxu0 0.0
    %145 = vmatprep.subr.mxu0 0.0
    %146 = vmatpush1.msra.mxu0 0.0
    %147 = vmatprep.subr.mxu0 0.0
    %148 = vmatpush1.msra.mxu0 0.0
    %149 = vmatprep.subr.mxu0 0.0
    %150 = vmatpush1.msra.mxu0 0.0
    %151 = vmatprep.mubr.f32.mxu0 0.0
    %152 = vmatmul.mubr.f32.gmra.mrb[0].mxu0 %v85
    %v153 = vpop.f32.mrb[0].mxu0
    %v154 = vadd.f32 %v81, %v153
    %v155 = vpop.f32.mrb[0].mxu0
    %156 = vdwg.mxu0
    %v157 = vmax.f32 %v154, 0.0
    %v158 = vld [vmem:[%s5] sm:$0xff]
    %v159 = vld [vmem:[%s5 + $0x8] sm:$0xff]
    %v160 = vld [vmem:[%s5 + $0x10] sm:$0xff]
    %v161 = vld [vmem:[%s5 + $0x18] sm:$0xff]
    %v162 = vld [vmem:[%s5 + $0x20] sm:$0xff]
    %v163 = vld [vmem:[%s5 + $0x28] sm:$0xff]
    %v164 = vld [vmem:[%s5 + $0x30] sm:$0xff]
    %v165 = vld [vmem:[%s5 + $0x38] sm:$0xff]
    %v166 = vld [vmem:[%s5 + $0x40] sm:$0xff]
    %v167 = vld [vmem:[%s5 + $0x48] sm:$0xff]
    %v168 = vld [vmem:[%s5 + $0x50] sm:$0xff]
    %v169 = vld [vmem:[%s5 + $0x58] sm:$0xff]
    %v170 = vld [vmem:[%s5 + $0x60] sm:$0xff]
    %v171 = vld [vmem:[%s5 + $0x68] sm:$0xff]
    %v172 = vld [vmem:[%s5 + $0x70] sm:$0xff]
    %v173 = vld [vmem:[%s5 + $0x78] sm:$0xff]
    %v174 = vld [vmem:[%s6] sm:$0x1]
    %v176 = vlaneseq
    %v177 = vshrl.u32 %v176, 7
    %v178 = vsub.s32 0, %v177
    %v179 = vrot.slane %v174, %v178
    %181 = vmatprep.subr.mxu0 0.0
    %182 = vmatpush1.msra.mxu0 %v158
    %183 = vmatprep.subr.mxu0 0.0
    %184 = vmatpush1.msra.mxu0 %v159
    %185 = vmatprep.subr.mxu0 0.0
    %186 = vmatpush1.msra.mxu0 %v160
    %187 = vmatprep.subr.mxu0 0.0
    %188 = vmatpush1.msra.mxu0 %v161
    %189 = vmatprep.subr.mxu0 0.0
    %190 = vmatpush1.msra.mxu0 %v162
    %191 = vmatprep.subr.mxu0 0.0
    %192 = vmatpush1.msra.mxu0 %v163
    %193 = vmatprep.subr.mxu0 0.0
    %194 = vmatpush1.msra.mxu0 %v164
    %195 = vmatprep.subr.mxu0 0.0
    %196 = vmatpush1.msra.mxu0 %v165
    %197 = vmatprep.subr.mxu0 0.0
    %198 = vmatpush1.msra.mxu0 %v166
    %199 = vmatprep.subr.mxu0 0.0
    %200 = vmatpush1.msra.mxu0 %v167
    %201 = vmatprep.subr.mxu0 0.0
    %202 = vmatpush1.msra.mxu0 %v168
    %203 = vmatprep.subr.mxu0 0.0
    %204 = vmatpush1.msra.mxu0 %v169
    %205 = vmatprep.subr.mxu0 0.0
    %206 = vmatpush1.msra.mxu0 %v170
    %207 = vmatprep.subr.mxu0 0.0
    %208 = vmatpush1.msra.mxu0 %v171
    %209 = vmatprep.subr.mxu0 0.0
    %210 = vmatpush1.msra.mxu0 %v172
    %211 = vmatprep.subr.mxu0 0.0
    %212 = vmatpush1.msra.mxu0 %v173
    %213 = vmatprep.subr.mxu0 0.0
    %214 = vmatpush1.msra.mxu0 0.0
    %215 = vmatprep.subr.mxu0 0.0
    %216 = vmatpush1.msra.mxu0 0.0
    %217 = vmatprep.subr.mxu0 0.0
    %218 = vmatpush1.msra.mxu0 0.0
    %219 = vmatprep.subr.mxu0 0.0
    %220 = vmatpush1.msra.mxu0 0.0
    %221 = vmatprep.subr.mxu0 0.0
    %222 = vmatpush1.msra.mxu0 0.0
    %223 = vmatprep.subr.mxu0 0.0
    %224 = vmatpush1.msra.mxu0 0.0
    %225 = vmatprep.subr.mxu0 0.0
    %226 = vmatpush1.msra.mxu0 0.0
    %227 = vmatprep.subr.mxu0 0.0
    %228 = vmatpush1.msra.mxu0 0.0
    %229 = vmatprep.subr.mxu0 0.0
    %230 = vmatpush1.msra.mxu0 0.0
    %231 = vmatprep.subr.mxu0 0.0
    %232 = vmatpush1.msra.mxu0 0.0
    %233 = vmatprep.subr.mxu0 0.0
    %234 = vmatpush1.msra.mxu0 0.0
    %235 = vmatprep.subr.mxu0 0.0
    %236 = vmatpush1.msra.mxu0 0.0
    %237 = vmatprep.subr.mxu0 0.0
    %238 = vmatpush1.msra.mxu0 0.0
    %239 = vmatprep.subr.mxu0 0.0
    %240 = vmatpush1.msra.mxu0 0.0
    %241 = vmatprep.subr.mxu0 0.0
    %242 = vmatpush1.msra.mxu0 0.0
    %243 = vmatprep.subr.mxu0 0.0
    %244 = vmatpush1.msra.mxu0 0.0
    %245 = vmatprep.mubr.f32.mxu0 0.0
    %246 = vmatmul.mubr.f32.gmra.mrb[0].mxu0 %v157
    %v247 = vpop.f32.mrb[0].mxu0
    %v248 = vadd.f32 %v179, %v247
    %v249 = vpop.f32.mrb[0].mxu0
    %250 = vdwg.mxu0
    %v251 = vmax.f32 %v248, 0.0
    %v252 = vld [vmem:[%s7] sm:$0xff]
    %v253 = vld [vmem:[%s7 + $0x8] sm:$0xff]
    %v254 = vld [vmem:[%s7 + $0x10] sm:$0xff]
    %v255 = vld [vmem:[%s7 + $0x18] sm:$0xff]
    %v256 = vld [vmem:[%s7 + $0x20] sm:$0xff]
    %v257 = vld [vmem:[%s7 + $0x28] sm:$0xff]
    %v258 = vld [vmem:[%s7 + $0x30] sm:$0xff]
    %v259 = vld [vmem:[%s7 + $0x38] sm:$0xff]
    %v260 = vld [vmem:[%s7 + $0x40] sm:$0xff]
    %v261 = vld [vmem:[%s7 + $0x48] sm:$0xff]
    %v262 = vld [vmem:[%s7 + $0x50] sm:$0xff]
    %v263 = vld [vmem:[%s7 + $0x58] sm:$0xff]
    %v264 = vld [vmem:[%s7 + $0x60] sm:$0xff]
    %v265 = vld [vmem:[%s7 + $0x68] sm:$0xff]
    %v266 = vld [vmem:[%s7 + $0x70] sm:$0xff]
    %v267 = vld [vmem:[%s7 + $0x78] sm:$0xff]
    %v268 = vld [vmem:[%s8] sm:$0x1]
    %v270 = vlaneseq
    %v271 = vshrl.u32 %v270, 7
    %v272 = vsub.s32 0, %v271
    %v273 = vrot.slane %v268, %v272
    %275 = vmatprep.subr.mxu0 0.0
    %276 = vmatpush1.msra.mxu0 %v252
    %277 = vmatprep.subr.mxu0 0.0
    %278 = vmatpush1.msra.mxu0 %v253
    %279 = vmatprep.subr.mxu0 0.0
    %280 = vmatpush1.msra.mxu0 %v254
    %281 = vmatprep.subr.mxu0 0.0
    %282 = vmatpush1.msra.mxu0 %v255
    %283 = vmatprep.subr.mxu0 0.0
    %284 = vmatpush1.msra.mxu0 %v256
    %285 = vmatprep.subr.mxu0 0.0
    %286 = vmatpush1.msra.mxu0 %v257
    %287 = vmatprep.subr.mxu0 0.0
    %288 = vmatpush1.msra.mxu0 %v258
    %289 = vmatprep.subr.mxu0 0.0
    %290 = vmatpush1.msra.mxu0 %v259
    %291 = vmatprep.subr.mxu0 0.0
    %292 = vmatpush1.msra.mxu0 %v260
    %293 = vmatprep.subr.mxu0 0.0
    %294 = vmatpush1.msra.mxu0 %v261
    %295 = vmatprep.subr.mxu0 0.0
    %296 = vmatpush1.msra.mxu0 %v262
    %297 = vmatprep.subr.mxu0 0.0
    %298 = vmatpush1.msra.mxu0 %v263
    %299 = vmatprep.subr.mxu0 0.0
    %300 = vmatpush1.msra.mxu0 %v264
    %301 = vmatprep.subr.mxu0 0.0
    %302 = vmatpush1.msra.mxu0 %v265
    %303 = vmatprep.subr.mxu0 0.0
    %304 = vmatpush1.msra.mxu0 %v266
    %305 = vmatprep.subr.mxu0 0.0
    %306 = vmatpush1.msra.mxu0 %v267
    %307 = vmatprep.subr.mxu0 0.0
    %308 = vmatpush1.msra.mxu0 0.0
    %309 = vmatprep.subr.mxu0 0.0
    %310 = vmatpush1.msra.mxu0 0.0
    %311 = vmatprep.subr.mxu0 0.0
    %312 = vmatpush1.msra.mxu0 0.0
    %313 = vmatprep.subr.mxu0 0.0
    %314 = vmatpush1.msra.mxu0 0.0
    %315 = vmatprep.subr.mxu0 0.0
    %316 = vmatpush1.msra.mxu0 0.0
    %317 = vmatprep.subr.mxu0 0.0
    %318 = vmatpush1.msra.mxu0 0.0
    %319 = vmatprep.subr.mxu0 0.0
    %320 = vmatpush1.msra.mxu0 0.0
    %321 = vmatprep.subr.mxu0 0.0
    %322 = vmatpush1.msra.mxu0 0.0
    %323 = vmatprep.subr.mxu0 0.0
    %324 = vmatpush1.msra.mxu0 0.0
    %325 = vmatprep.subr.mxu0 0.0
    %326 = vmatpush1.msra.mxu0 0.0
    %327 = vmatprep.subr.mxu0 0.0
    %328 = vmatpush1.msra.mxu0 0.0
    %329 = vmatprep.subr.mxu0 0.0
    %330 = vmatpush1.msra.mxu0 0.0
    %331 = vmatprep.subr.mxu0 0.0
    %332 = vmatpush1.msra.mxu0 0.0
    %333 = vmatprep.subr.mxu0 0.0
    %334 = vmatpush1.msra.mxu0 0.0
    %335 = vmatprep.subr.mxu0 0.0
    %336 = vmatpush1.msra.mxu0 0.0
    %337 = vmatprep.subr.mxu0 0.0
    %338 = vmatpush1.msra.mxu0 0.0
    %339 = vmatprep.mubr.f32.mxu0 0.0
    %340 = vmatmul.mubr.f32.gmra.mrb[0].mxu0 %v251
    %v341 = vpop.f32.mrb[0].mxu0
    %v342 = vadd.f32 %v273, %v341
    %v343 = vpop.f32.mrb[0].mxu0
    %344 = vdwg.mxu0
    %vm345 = vcmask 31744
    %346 = vst.msk [vmem:[%s9] sm:$0xff] %vm345, %v342
    // Predicated region
    $region42: #{tpu_custom_call.1} parent=1 // pred_check
      _
    $region43: #{tpu_custom_call.1} parent=1 // pred_check_branch
      %348 = sbr.rel (0) target = $region45
    $region44: #{tpu_custom_call.1} parent=1 // pred_region
      _
    $region45: #{tpu_custom_call.1} parent=1 // pred_fallthru
      _
    // Predicated region
    $region46: #{tpu_custom_call.1} parent=1 // pred_check
      _
    $region47: #{tpu_custom_call.1} parent=1 // pred_check_branch
      %350 = sbr.rel (0) target = $region49
    $region48: #{tpu_custom_call.1} parent=1 // pred_region
      _
    $region49: #{tpu_custom_call.1} parent=1 // pred_fallthru
      _
    %351 = vsyncpa [#allocation3], 1

</llo_original>
